<compile_context>
chip_gen: v7x
topology: tpu7x:2x2x1
jax: 0.10.0
libtpu: 0.0.40
codegen_flags: <defaults>
</compile_context>

<pallas_src>
import functools

import jax
import jax.numpy as jnp
from jax.experimental import pallas as pl
from jax.experimental.pallas import tpu as pltpu

HIDDEN = 256


def _v_kernel(obs_ref,
              w1_ref, b1_ref,
              w2_ref, b2_ref,
              w3_ref, b3_ref,
              w4_ref, b4_ref,
              out_ref):
    """Fused MLP forward for one batch tile.

    Matmuls run on the MXU in bf16 with f32 accumulation; bias adds, ReLUs and the final
    256->1 reduction run on the VPU/XLU in f32. All weights stay resident in VMEM.
    """
    x = obs_ref[...].astype(jnp.bfloat16)

    h = jnp.dot(x, w1_ref[...], preferred_element_type=jnp.float32) + b1_ref[...]
    h = jnp.maximum(h, 0.0)

    h = jnp.dot(h.astype(jnp.bfloat16), w2_ref[...],
                preferred_element_type=jnp.float32) + b2_ref[...]
    h = jnp.maximum(h, 0.0)

    h = jnp.dot(h.astype(jnp.bfloat16), w3_ref[...],
                preferred_element_type=jnp.float32) + b3_ref[...]
    h = jnp.maximum(h, 0.0)

    # 256 -> 1 layer: w4 is (1, 256), broadcast-multiply + lane reduction (VPU + XLU).
    out = jnp.sum(h * w4_ref[...], axis=-1, keepdims=True) + b4_ref[...]
    out_ref[...] = out.astype(out_ref.dtype)


def _choose_batch_tile(B, D):
    """Pick the batch tile.

    One big tile (up to 1024 rows) wins for small/medium batches: each grid step costs
    ~0.35 us of pipeline overhead and a tiny M tile leaves most of the MXU idle. Only
    the (double-buffered, f32) obs tile VMEM budget caps the tile; we never shrink just
    to create extra grid steps.
    """
    tile = 1024
    # Keep the double-buffered obs tile under ~8 MiB of VMEM (matters only for very
    # large D / v7x's 64 MiB physical VMEM).
    while tile > 8 and 2 * tile * D * 4 > 8 * 2**20:
        tile //= 2
    rounded_b = ((B + 7) // 8) * 8          # round_up(B, 8)
    return max(8, min(tile, rounded_b))


@functools.partial(jax.jit, static_argnames=("batch_tile",))
def v_forward(obs, params, batch_tile=None):
    """Pallas implementation of V.forward.

    obs: (B, D) float32 -> (B, 1) float32.
    params: output of prepare_params() (W1..W3 already bf16, biases/W4 f32).
    """
    B, D = obs.shape
    w1, b1, w2, b2, w3, b3, w4, b4 = params

    tile = batch_tile if batch_tile is not None else _choose_batch_tile(B, D)
    assert tile % 8 == 0, "batch_tile must be a multiple of 8"

    grid = (pl.cdiv(B, tile),)

    # Full-extent (untiled) specs for the small weight/bias tensors.
    def full_spec(shape):
        return pl.BlockSpec(shape, lambda i: (0,) * len(shape))

    # Advisory cost estimate for XLA's scheduler.
    flops = 2 * B * (D * HIDDEN + 2 * HIDDEN * HIDDEN + HIDDEN)
    weight_bytes = ((D * HIDDEN + 2 * HIDDEN * HIDDEN) * 2      # bf16 W1..W3
                    + 3 * HIDDEN * 4                            # f32 b1..b3
                    + HIDDEN * 4 + 4)                           # f32 W4, b4
    bytes_accessed = B * D * 4 + B * 4 + weight_bytes

    # Explicit VMEM budget: double-buffered obs/out tiles + double-buffered weights +
    # room for f32/bf16 activation temporaries, plus a small margin. Stays well under
    # the default scoped limit on all chips.
    vmem_need = (2 * tile * D * 4 + 2 * tile * 4
                 + 2 * weight_bytes + 4 * tile * HIDDEN * 4)
    vmem_limit = int(vmem_need + 8 * 2**20)

    return pl.pallas_call(
        _v_kernel,
        out_shape=jax.ShapeDtypeStruct((B, 1), jnp.float32),
        grid_spec=pltpu.PrefetchScalarGridSpec(
            num_scalar_prefetch=0,
            grid=grid,
            in_specs=[
                pl.BlockSpec((tile, D), lambda i: (i, 0)),      # obs tile
                full_spec(w1.shape), full_spec(b1.shape),
                full_spec(w2.shape), full_spec(b2.shape),
                full_spec(w3.shape), full_spec(b3.shape),
                full_spec(w4.shape), full_spec(b4.shape),
            ],
            out_specs=pl.BlockSpec((tile, 1), lambda i: (i, 0)),
        ),
        compiler_params=pltpu.CompilerParams(
            dimension_semantics=("parallel",),
            vmem_limit_bytes=vmem_limit,
        ),
        cost_estimate=pl.CostEstimate(
            flops=int(flops),
            transcendentals=0,
            bytes_accessed=int(bytes_accessed),
        ),
    )(obs, w1, b1, w2, b2, w3, b3, w4, b4)


def init_params(key, dim_observation):
    """Deterministic f32 init mirroring V.__init__ shapes (PyTorch-Linear uniform bounds).

    W1..W3 stored as (in, out); W4 stored as (1, 256) (torch-native (out, in)); biases
    stored as (1, out).
    """
    layer_dims = [(dim_observation, HIDDEN), (HIDDEN, HIDDEN), (HIDDEN, HIDDEN), (HIDDEN, 1)]
    params = []
    for idx, (fan_in, fan_out) in enumerate(layer_dims):
        key, kw, kb = jax.random.split(key, 3)
        bound = 1.0 / (fan_in ** 0.5)
        if idx == len(layer_dims) - 1:
            w = jax.random.uniform(kw, (fan_out, fan_in), jnp.float32, -bound, bound)
        else:
            w = jax.random.uniform(kw, (fan_in, fan_out), jnp.float32, -bound, bound)
        b = jax.random.uniform(kb, (1, fan_out), jnp.float32, -bound, bound)
        params += [w, b]
    return tuple(params)


def prepare_params(params):
    """One-time conversion to the kernel's parameter format (bf16 W1..W3).

    Call once at init/update time so the per-call path has no extra cast/HBM pass.
    """
    w1, b1, w2, b2, w3, b3, w4, b4 = params
    return (w1.astype(jnp.bfloat16), b1,
            w2.astype(jnp.bfloat16), b2,
            w3.astype(jnp.bfloat16), b3,
            w4, b4)


def v_forward_ref(obs, params):
    """Pure-JAX reference mirroring the kernel's numerics (bf16 matmuls, f32 accum)."""
    w1, b1, w2, b2, w3, b3, w4, b4 = params
    bf, f32 = jnp.bfloat16, jnp.float32
    h = jnp.maximum(
        jnp.dot(obs.astype(bf), w1.astype(bf), preferred_element_type=f32) + b1, 0.0)
    h = jnp.maximum(
        jnp.dot(h.astype(bf), w2.astype(bf), preferred_element_type=f32) + b2, 0.0)
    h = jnp.maximum(
        jnp.dot(h.astype(bf), w3.astype(bf), preferred_element_type=f32) + b3, 0.0)
    return jnp.dot(h, w4.T, preferred_element_type=f32) + b4


if __name__ == "__main__":
    key = jax.random.PRNGKey(0)
    key, k_obs, k_params = jax.random.split(key, 3)

    batch = 50                # ragged vs the 8-row granularity -> exercises padding
    dim_observation = 32

    obs = jax.random.normal(k_obs, (batch, dim_observation), jnp.float32)
    params = init_params(k_params, dim_observation)
    kernel_params = prepare_params(params)   # bf16 weight cache, done once

    out = jax.block_until_ready(v_forward(obs, kernel_params))
    ref = jax.block_until_ready(v_forward_ref(obs, params))

    assert out.shape == (batch, 1), out.shape
    assert jnp.allclose(out, ref, atol=1e-2, rtol=1e-2), (out, ref)

    print("KERNEL_OK")
</pallas_src>

<mosaic_0001>
module attributes {stable_mosaic.version = 11 : i64} {
  func.func @_v_kernel(%arg0: i32, %arg1: memref<56x32xf32, #tpu.memory_space<vmem>>, %arg2: memref<32x256xbf16, #tpu.memory_space<vmem>>, %arg3: memref<1x256xf32, #tpu.memory_space<vmem>>, %arg4: memref<256x256xbf16, #tpu.memory_space<vmem>>, %arg5: memref<1x256xf32, #tpu.memory_space<vmem>>, %arg6: memref<256x256xbf16, #tpu.memory_space<vmem>>, %arg7: memref<1x256xf32, #tpu.memory_space<vmem>>, %arg8: memref<1x256xf32, #tpu.memory_space<vmem>>, %arg9: memref<1x1xf32, #tpu.memory_space<vmem>>, %arg10: memref<56x1xf32, #tpu.memory_space<vmem>>) attributes {dimension_semantics = [#tpu.dimension_semantics<parallel>], iteration_bounds = array<i64: 1>, scalar_prefetch = 0 : i64, scratch_operands = 0 : i64, tpu.core_type = #tpu.core_type<tc>, window_params = [{transform_indices = @transform_0, window_bounds = array<i64: 56, 32>}, {pipeline_mode = #tpu.pipeline_mode<synchronous>, transform_indices = @transform_1, window_bounds = array<i64: 32, 256>}, {pipeline_mode = #tpu.pipeline_mode<synchronous>, transform_indices = @transform_2, window_bounds = array<i64: 1, 256>}, {pipeline_mode = #tpu.pipeline_mode<synchronous>, transform_indices = @transform_3, window_bounds = array<i64: 256, 256>}, {pipeline_mode = #tpu.pipeline_mode<synchronous>, transform_indices = @transform_4, window_bounds = array<i64: 1, 256>}, {pipeline_mode = #tpu.pipeline_mode<synchronous>, transform_indices = @transform_5, window_bounds = array<i64: 256, 256>}, {pipeline_mode = #tpu.pipeline_mode<synchronous>, transform_indices = @transform_6, window_bounds = array<i64: 1, 256>}, {pipeline_mode = #tpu.pipeline_mode<synchronous>, transform_indices = @transform_7, window_bounds = array<i64: 1, 256>}, {pipeline_mode = #tpu.pipeline_mode<synchronous>, transform_indices = @transform_8, window_bounds = array<i64: 1, 1>}, {transform_indices = @transform_9, window_bounds = array<i64: 56, 1>}]} {
    %c0 = arith.constant 0 : index
    %c0_0 = arith.constant 0 : index
    %0 = vector.load %arg1[%c0, %c0_0] : memref<56x32xf32, #tpu.memory_space<vmem>>, vector<56x32xf32>
    %1 = arith.truncf %0 : vector<56x32xf32> to vector<56x32xbf16>
    %c0_1 = arith.constant 0 : index
    %c0_2 = arith.constant 0 : index
    %2 = vector.load %arg2[%c0_1, %c0_2] : memref<32x256xbf16, #tpu.memory_space<vmem>>, vector<32x256xbf16>
    %cst = arith.constant dense<0.000000e+00> : vector<56x256xf32>
    %3 = tpu.matmul %1, %2, %cst {dimension_numbers = #tpu.dot_dimension_numbers<[1], [0], [0], [1], [0, 0, 1, 1], [], []>} : vector<56x32xbf16>, vector<32x256xbf16>, vector<56x256xf32> -> vector<56x256xf32>
    %c0_3 = arith.constant 0 : index
    %c0_4 = arith.constant 0 : index
    %4 = vector.load %arg3[%c0_3, %c0_4] : memref<1x256xf32, #tpu.memory_space<vmem>>, vector<1x256xf32>
    %5 = vector.broadcast %4 : vector<1x256xf32> to vector<56x256xf32>
    %6 = arith.addf %3, %5 : vector<56x256xf32>
    %cst_5 = arith.constant 0.000000e+00 : f32
    %7 = vector.broadcast %cst_5 : f32 to vector<56x256xf32>
    %8 = arith.maximumf %6, %7 : vector<56x256xf32>
    %9 = arith.truncf %8 : vector<56x256xf32> to vector<56x256xbf16>
    %c0_6 = arith.constant 0 : index
    %c0_7 = arith.constant 0 : index
    %10 = vector.load %arg4[%c0_6, %c0_7] : memref<256x256xbf16, #tpu.memory_space<vmem>>, vector<256x256xbf16>
    %cst_8 = arith.constant dense<0.000000e+00> : vector<56x256xf32>
    %11 = tpu.matmul %9, %10, %cst_8 {dimension_numbers = #tpu.dot_dimension_numbers<[1], [0], [0], [1], [0, 0, 1, 1], [], []>} : vector<56x256xbf16>, vector<256x256xbf16>, vector<56x256xf32> -> vector<56x256xf32>
    %c0_9 = arith.constant 0 : index
    %c0_10 = arith.constant 0 : index
    %12 = vector.load %arg5[%c0_9, %c0_10] : memref<1x256xf32, #tpu.memory_space<vmem>>, vector<1x256xf32>
    %13 = vector.broadcast %12 : vector<1x256xf32> to vector<56x256xf32>
    %14 = arith.addf %11, %13 : vector<56x256xf32>
    %cst_11 = arith.constant 0.000000e+00 : f32
    %15 = vector.broadcast %cst_11 : f32 to vector<56x256xf32>
    %16 = arith.maximumf %14, %15 : vector<56x256xf32>
    %17 = arith.truncf %16 : vector<56x256xf32> to vector<56x256xbf16>
    %c0_12 = arith.constant 0 : index
    %c0_13 = arith.constant 0 : index
    %18 = vector.load %arg6[%c0_12, %c0_13] : memref<256x256xbf16, #tpu.memory_space<vmem>>, vector<256x256xbf16>
    %cst_14 = arith.constant dense<0.000000e+00> : vector<56x256xf32>
    %19 = tpu.matmul %17, %18, %cst_14 {dimension_numbers = #tpu.dot_dimension_numbers<[1], [0], [0], [1], [0, 0, 1, 1], [], []>} : vector<56x256xbf16>, vector<256x256xbf16>, vector<56x256xf32> -> vector<56x256xf32>
    %c0_15 = arith.constant 0 : index
    %c0_16 = arith.constant 0 : index
    %20 = vector.load %arg7[%c0_15, %c0_16] : memref<1x256xf32, #tpu.memory_space<vmem>>, vector<1x256xf32>
    %21 = vector.broadcast %20 : vector<1x256xf32> to vector<56x256xf32>
    %22 = arith.addf %19, %21 : vector<56x256xf32>
    %cst_17 = arith.constant 0.000000e+00 : f32
    %23 = vector.broadcast %cst_17 : f32 to vector<56x256xf32>
    %24 = arith.maximumf %22, %23 : vector<56x256xf32>
    %c0_18 = arith.constant 0 : index
    %c0_19 = arith.constant 0 : index
    %25 = vector.load %arg8[%c0_18, %c0_19] : memref<1x256xf32, #tpu.memory_space<vmem>>, vector<1x256xf32>
    %26 = vector.broadcast %25 : vector<1x256xf32> to vector<56x256xf32>
    %27 = arith.mulf %24, %26 : vector<56x256xf32>
    %cst_20 = arith.constant dense<0.000000e+00> : vector<56xf32>
    %28 = vector.multi_reduction <add>, %27, %cst_20 [1] : vector<56x256xf32> to vector<56xf32>
    %29 = vector.shape_cast %28 : vector<56xf32> to vector<56x1xf32>
    %c0_21 = arith.constant 0 : index
    %c0_22 = arith.constant 0 : index
    %30 = vector.load %arg9[%c0_21, %c0_22] : memref<1x1xf32, #tpu.memory_space<vmem>>, vector<1x1xf32>
    %31 = vector.broadcast %30 : vector<1x1xf32> to vector<56x1xf32>
    %32 = arith.addf %29, %31 : vector<56x1xf32>
    %c0_23 = arith.constant 0 : index
    %c0_24 = arith.constant 0 : index
    %33 = vector.load %arg10[%c0_23, %c0_24] : memref<56x1xf32, #tpu.memory_space<vmem>>, vector<56x1xf32>
    tpu.vector_store %arg10[%c0_23, %c0_24], %32 {strides = array<i32>} : memref<56x1xf32, #tpu.memory_space<vmem>>, vector<56x1xf32>,
    return
  }
  func.func @transform_0(%arg0: i32) -> (i32, i32) {
    %c0_i32 = arith.constant 0 : i32
    %c0_i32_0 = arith.constant 0 : i32
    return %arg0, %c0_i32 : i32, i32
  }
  func.func @transform_1(%arg0: i32) -> (i32, i32) {
    %c0_i32 = arith.constant 0 : i32
    %c0_i32_0 = arith.constant 0 : i32
    %c0_i32_1 = arith.constant 0 : i32
    return %c0_i32, %c0_i32_0 : i32, i32
  }
  func.func @transform_2(%arg0: i32) -> (i32, i32) {
    %c0_i32 = arith.constant 0 : i32
    %c0_i32_0 = arith.constant 0 : i32
    %c0_i32_1 = arith.constant 0 : i32
    return %c0_i32, %c0_i32_0 : i32, i32
  }
  func.func @transform_3(%arg0: i32) -> (i32, i32) {
    %c0_i32 = arith.constant 0 : i32
    %c0_i32_0 = arith.constant 0 : i32
    %c0_i32_1 = arith.constant 0 : i32
    return %c0_i32, %c0_i32_0 : i32, i32
  }
  func.func @transform_4(%arg0: i32) -> (i32, i32) {
    %c0_i32 = arith.constant 0 : i32
    %c0_i32_0 = arith.constant 0 : i32
    %c0_i32_1 = arith.constant 0 : i32
    return %c0_i32, %c0_i32_0 : i32, i32
  }
  func.func @transform_5(%arg0: i32) -> (i32, i32) {
    %c0_i32 = arith.constant 0 : i32
    %c0_i32_0 = arith.constant 0 : i32
    %c0_i32_1 = arith.constant 0 : i32
    return %c0_i32, %c0_i32_0 : i32, i32
  }
  func.func @transform_6(%arg0: i32) -> (i32, i32) {
    %c0_i32 = arith.constant 0 : i32
    %c0_i32_0 = arith.constant 0 : i32
    %c0_i32_1 = arith.constant 0 : i32
    return %c0_i32, %c0_i32_0 : i32, i32
  }
  func.func @transform_7(%arg0: i32) -> (i32, i32) {
    %c0_i32 = arith.constant 0 : i32
    %c0_i32_0 = arith.constant 0 : i32
    %c0_i32_1 = arith.constant 0 : i32
    return %c0_i32, %c0_i32_0 : i32, i32
  }
  func.func @transform_8(%arg0: i32) -> (i32, i32) {
    %c0_i32 = arith.constant 0 : i32
    %c0_i32_0 = arith.constant 0 : i32
    %c0_i32_1 = arith.constant 0 : i32
    return %c0_i32, %c0_i32_0 : i32, i32
  }
  func.func @transform_9(%arg0: i32) -> (i32, i32) {
    %c0_i32 = arith.constant 0 : i32
    %c0_i32_0 = arith.constant 0 : i32
    return %arg0, %c0_i32 : i32, i32
  }
}

</mosaic_0001>

<llo_original>
// kernel: v_forward.1
$region0: #{v_forward.1}
  #allocation0 [shape = 'u32[]', space=smem, size = 0x4, offset = 0x4, fixed_abs, tag = 'smem constant byte address 0x4 - core index']
  #allocation1 [shape = 'u32[144,128]{1,0:T(1,128)}', space=vmem, size = 0x12000, scoped, tag = 'internal scratch']
  #allocation2 [shape = 'f32[1,1]{1,0:T(1,128)S(1)}', space=vmem, size = 0x200, scoped, tag = 'scoped memory for v_forward.1']
  %s0 = inlined_call_operand.vmem [shape: f32[50,32], index: 0, kind: input, shape index: {}]
  %s1 = inlined_call_operand.vmem [shape: bf16[32,256], index: 1, kind: input, shape index: {}]
  %s2 = inlined_call_operand.vmem [shape: f32[1,256], index: 2, kind: input, shape index: {}]
  %s3 = inlined_call_operand.hbm [shape: bf16[256,256], index: 3, kind: input, shape index: {}]
  %s4 = inlined_call_operand.vmem [shape: f32[1,256], index: 4, kind: input, shape index: {}]
  %s5 = inlined_call_operand.hbm [shape: bf16[256,256], index: 5, kind: input, shape index: {}]
  %s6 = inlined_call_operand.vmem [shape: f32[1,256], index: 6, kind: input, shape index: {}]
  %s7 = inlined_call_operand.vmem [shape: f32[1,256], index: 7, kind: input, shape index: {}]
  %s8 = inlined_call_operand.<no memory space> [shape: f32[1,1], index: 8, kind: input, shape index: {}]
  %s9 = inlined_call_operand.vmem [shape: f32[50,1], index: 9, kind: output, shape index: {}]
  %s10 = sld [smem:[#allocation0]]
  $region54: #{v_forward.1} parent=0
    _
  %s12 = ssub.s32 1, %s10
  %s13 = scalar_select 0, %s12, %s10
  %v14 = vstv %s8
  %15 = vst [vmem:[#allocation2] sm:$0x1] %v14
  $region1: #{v_forward.1} parent=0
    #allocation3 [shape = 'u8[131072]{0}', space=vmem, size = 0x20000, scoped, tag = 'input window, operand 3, single buffered']
    #allocation4 [shape = 's32[1]{0}', space=sflag, size = 0x4, scoped, tag = 'scoped memory for v_forward.1']
    #allocation5 [shape = 'u8[131072]{0}', space=vmem, size = 0x20000, scoped, tag = 'input window, operand 5, single buffered']
    #allocation6 [shape = 's32[1]{0}', space=sflag, size = 0x4, scoped, tag = 'scoped memory for v_forward.1']
    %16 = vsyncpa [#allocation4], 0
    %17 = vsyncpa [#allocation6], 0
    // Predicated region
    $region2: #{v_forward.1} parent=1 // pred_check
      _
    $region3: #{v_forward.1} parent=1 // pred_check_branch
      %19 = sbr.rel (0) target = $region5
    $region4: #{v_forward.1} parent=1 // pred_region
      _
    $region5: #{v_forward.1} parent=1 // pred_fallthru
      _
    // Predicated region
    $region6: #{v_forward.1} parent=1 // pred_check
      _
    $region7: #{v_forward.1} parent=1 // pred_check_branch
      %21 = sbr.rel (0) target = $region9
    $region8: #{v_forward.1} parent=1 // pred_region
      _
    $region9: #{v_forward.1} parent=1 // pred_fallthru
      _
    // Predicated region
    $region10: #{v_forward.1} parent=1 // pred_check
      _
    $region11: #{v_forward.1} parent=1 // pred_check_branch
      %23 = sbr.rel (0) target = $region13
    $region12: #{v_forward.1} parent=1 // pred_region
      _
    $region13: #{v_forward.1} parent=1 // pred_fallthru
      _
    // Predicated region
    $region14: #{v_forward.1} parent=1 // pred_check
      _
    $region15: #{v_forward.1} parent=1 // pred_check_branch
      %25 = sbr.rel (0) target = $region17
    $region16: #{v_forward.1} parent=1 // pred_region
      %s27 = ssub.s32 4096, 4096
      %28 = vsyncadd [#allocation4], %s27
      %s29 = sshll.u32 [#allocation3], 4
      %s30 = int_to_ptr.vmem [resolvable:$true] %s29
      %35 = dma.hbm_to_vmem [thread:$0]  %s3, 4096, %s30, [#allocation4], 128, 128, 8
    $region17: #{v_forward.1} parent=1 // pred_fallthru
      _
    // Predicated region
    $region18: #{v_forward.1} parent=1 // pred_check
      _
    $region19: #{v_forward.1} parent=1 // pred_check_branch
      %37 = sbr.rel (0) target = $region21
    $region20: #{v_forward.1} parent=1 // pred_region
      _
    $region21: #{v_forward.1} parent=1 // pred_fallthru
      _
    // Predicated region
    $region22: #{v_forward.1} parent=1 // pred_check
      _
    $region23: #{v_forward.1} parent=1 // pred_check_branch
      %39 = sbr.rel (0) target = $region25
    $region24: #{v_forward.1} parent=1 // pred_region
      %s41 = ssub.s32 4096, 4096
      %42 = vsyncadd [#allocation6], %s41
      %s43 = sshll.u32 [#allocation5], 4
      %s44 = int_to_ptr.vmem [resolvable:$true] %s43
      %49 = dma.hbm_to_vmem [thread:$0]  %s5, 4096, %s44, [#allocation6], 128, 128, 8
    $region25: #{v_forward.1} parent=1 // pred_fallthru
      _
    // Predicated region
    $region26: #{v_forward.1} parent=1 // pred_check
      _
    $region27: #{v_forward.1} parent=1 // pred_check_branch
      %51 = sbr.rel (0) target = $region29
    $region28: #{v_forward.1} parent=1 // pred_region
      _
    $region29: #{v_forward.1} parent=1 // pred_fallthru
      _
    // Predicated region
    $region30: #{v_forward.1} parent=1 // pred_check
      _
    $region31: #{v_forward.1} parent=1 // pred_check_branch
      %53 = sbr.rel (0) target = $region33
    $region32: #{v_forward.1} parent=1 // pred_region
      _
    $region33: #{v_forward.1} parent=1 // pred_fallthru
      _
    // Predicated region
    $region34: #{v_forward.1} parent=1 // pred_check
      _
    $region35: #{v_forward.1} parent=1 // pred_check_branch
      %55 = sbr.rel (0) target = $region37
    $region36: #{v_forward.1} parent=1 // pred_region
      _
    $region37: #{v_forward.1} parent=1 // pred_fallthru
      _
    // Predicated region
    $region38: #{v_forward.1} parent=1 // pred_check
      _
    $region39: #{v_forward.1} parent=1 // pred_check_branch
      %57 = sbr.rel (0) target = $region41
    $region40: #{v_forward.1} parent=1 // pred_region
      %58 = dma.done [#allocation4], 4096
    $region41: #{v_forward.1} parent=1 // pred_fallthru
      _
    // Predicated region
    $region42: #{v_forward.1} parent=1 // pred_check
      _
    $region43: #{v_forward.1} parent=1 // pred_check_branch
      %60 = sbr.rel (0) target = $region45
    $region44: #{v_forward.1} parent=1 // pred_region
      %61 = dma.done [#allocation6], 4096
    $region45: #{v_forward.1} parent=1 // pred_fallthru
      _
    %v63 = vld [vmem:[%s0] sm:$0xff]
    %v64 = vld [vmem:[%s0 + $0x8] sm:$0xff]
    %v65 = vld [vmem:[%s0 + $0x10] sm:$0xff]
    %v66 = vld [vmem:[%s0 + $0x18] sm:$0xff]
    %v67 = vld [vmem:[%s0 + $0x20] sm:$0xff]
    %v68 = vld [vmem:[%s0 + $0x28] sm:$0xff]
    %v69 = vld [vmem:[%s0 + $0x30] sm:$0xff]
    %v70 = vpack.c.bf16 %v64, %v63
    %v71 = vpack.c.bf16 %v66, %v65
    %v72 = vpack.c.bf16 %v68, %v67
    %v73 = vpack.c.bf16 %v69, %v69
    %v74 = vld [vmem:[%s1] sm:$0xff]
    %v75 = vld [vmem:[%s1 + $0x8] sm:$0xff]
    %v76 = vld [vmem:[%s1 + $0x10] sm:$0xff]
    %v77 = vld [vmem:[%s1 + $0x18] sm:$0xff]
    %v78 = vld [vmem:[%s2] sm:$0x3]
    %v80 = vlaneseq
    %v81 = vshrl.u32 %v80, 7
    %v82 = vsub.s32 0, %v81
    %v83 = vrot.slane %v78, %v82
    %v84 = vlaneseq
    %v85 = vshrl.u32 %v84, 7
    %v86 = vsub.s32 1, %v85
    %v87 = vrot.slane %v78, %v86
    %v94 = vunpack.c.l.b16 %v74
    %v95 = vunpack.c.h.b16 %v74
    %v96 = vunpack.c.l.b16 %v75
    %v97 = vunpack.c.h.b16 %v75
    %v98 = vunpack.c.l.b16 %v76
    %v99 = vunpack.c.h.b16 %v76
    %v100 = vunpack.c.l.b16 %v77
    %v101 = vunpack.c.h.b16 %v77
    %v102 = vpack.c.b16 %v96, %v94
    %v103 = vpack.c.b16 %v97, %v95
    %v104 = vpack.c.b16 %v100, %v98
    %v105 = vpack.c.b16 %v101, %v99
    %vm110 = vcmask 261120
    %v112 = vsel %vm110, %v70, 0
    %v115 = vsel %vm110, %v71, 0
    %v118 = vsel %vm110, %v72, 0
    %v121 = vsel %vm110, %v73, 0
    %123 = vmatprep.subr.bf16.mxu0 %v103
    %124 = vmatpush1.bf16.msra.mxu0 %v102
    %125 = vmatprep.subr.bf16.mxu0 %v105
    %126 = vmatpush1.bf16.msra.mxu0 %v104
    %127 = vmatprep.subr.bf16.mxu0 0
    %128 = vmatpush1.bf16.msra.mxu0 0
    %129 = vmatprep.subr.bf16.mxu0 0
    %130 = vmatpush1.bf16.msra.mxu0 0
    %131 = vmatprep.subr.bf16.mxu0 0
    %132 = vmatpush1.bf16.msra.mxu0 0
    %133 = vmatprep.subr.bf16.mxu0 0
    %134 = vmatpush1.bf16.msra.mxu0 0
    %135 = vmatprep.subr.bf16.mxu0 0
    %136 = vmatpush1.bf16.msra.mxu0 0
    %137 = vmatprep.subr.bf16.mxu0 0
    %138 = vmatpush1.bf16.msra.mxu0 0
    %139 = vmatprep.subr.bf16.mxu0 0
    %140 = vmatpush1.bf16.msra.mxu0 0
    %141 = vmatprep.subr.bf16.mxu0 0
    %142 = vmatpush1.bf16.msra.mxu0 0
    %143 = vmatprep.subr.bf16.mxu0 0
    %144 = vmatpush1.bf16.msra.mxu0 0
    %145 = vmatprep.subr.bf16.mxu0 0
    %146 = vmatpush1.bf16.msra.mxu0 0
    %147 = vmatprep.subr.bf16.mxu0 0
    %148 = vmatpush1.bf16.msra.mxu0 0
    %149 = vmatprep.subr.bf16.mxu0 0
    %150 = vmatpush1.bf16.msra.mxu0 0
    %151 = vmatprep.subr.bf16.mxu0 0
    %152 = vmatpush1.bf16.msra.mxu0 0
    %153 = vmatprep.subr.bf16.mxu0 0
    %154 = vmatpush1.bf16.msra.mxu0 0
    %155 = vmatprep.mubr.bf16.mxu0 0
    %156 = vmatmul.mubr.bf16.gmra.mrb[0].mxu0 %v112
    %v157 = vpop.f32.mrb[0].mxu0
    %v158 = vadd.f32 %v83, %v157
    %v159 = vpop.f32.mrb[0].mxu0
    %v160 = vadd.f32 %v87, %v159
    %v161 = vpop.f32.mrb[0].mxu0
    %v162 = vadd.f32 %v83, %v161
    %v163 = vpop.f32.mrb[0].mxu0
    %v164 = vadd.f32 %v87, %v163
    %165 = vmatprep.mubr.bf16.mxu0 0
    %166 = vmatmul.mubr.bf16.gmra.mrb[0].mxu0 %v115
    %v167 = vpop.f32.mrb[0].mxu0
    %v168 = vadd.f32 %v83, %v167
    %v169 = vpop.f32.mrb[0].mxu0
    %v170 = vadd.f32 %v87, %v169
    %v171 = vpop.f32.mrb[0].mxu0
    %v172 = vadd.f32 %v83, %v171
    %v173 = vpop.f32.mrb[0].mxu0
    %v174 = vadd.f32 %v87, %v173
    %175 = vmatprep.mubr.bf16.mxu0 0
    %176 = vmatmul.mubr.bf16.gmra.mrb[0].mxu0 %v118
    %v177 = vpop.f32.mrb[0].mxu0
    %v178 = vadd.f32 %v83, %v177
    %v179 = vpop.f32.mrb[0].mxu0
    %v180 = vadd.f32 %v87, %v179
    %v181 = vpop.f32.mrb[0].mxu0
    %v182 = vadd.f32 %v83, %v181
    %v183 = vpop.f32.mrb[0].mxu0
    %v184 = vadd.f32 %v87, %v183
    %185 = vmatprep.mubr.bf16.mxu0 0
    %186 = vmatmul.mubr.bf16.gmra.mrb[0].mxu0 %v121
    %v187 = vpop.f32.mrb[0].mxu0
    %v188 = vadd.f32 %v83, %v187
    %v189 = vpop.f32.mrb[0].mxu0
    %v190 = vadd.f32 %v87, %v189
    %v191 = vpop.f32.mrb[0].mxu0
    %v192 = vpop.f32.mrb[0].mxu0
    %193 = vdwg.mxu0
    %v194 = vmax.f32 %v158, 0.0
    %v195 = vmax.f32 %v160, 0.0
    %v196 = vmax.f32 %v162, 0.0
    %v197 = vmax.f32 %v164, 0.0
    %v198 = vmax.f32 %v168, 0.0
    %v199 = vmax.f32 %v170, 0.0
    %v200 = vmax.f32 %v172, 0.0
    %v201 = vmax.f32 %v174, 0.0
    %v202 = vmax.f32 %v178, 0.0
    %v203 = vmax.f32 %v180, 0.0
    %v204 = vmax.f32 %v182, 0.0
    %v205 = vmax.f32 %v184, 0.0
    %v206 = vmax.f32 %v188, 0.0
    %v207 = vmax.f32 %v190, 0.0
    %v208 = vpack.c.bf16 %v196, %v194
    %v209 = vpack.c.bf16 %v197, %v195
    %v210 = vpack.c.bf16 %v200, %v198
    %v211 = vpack.c.bf16 %v201, %v199
    %v212 = vpack.c.bf16 %v204, %v202
    %v213 = vpack.c.bf16 %v205, %v203
    %v214 = vpack.c.bf16 %v206, %v206
    %v215 = vpack.c.bf16 %v207, %v207
    %v216 = vld [vmem:[#allocation3] sm:$0xff]
    %v217 = vld [vmem:[#allocation3 + $0x8] sm:$0xff]
    %v218 = vld [vmem:[#allocation3 + $0x10] sm:$0xff]
    %v219 = vld [vmem:[#allocation3 + $0x18] sm:$0xff]
    %v220 = vld [vmem:[#allocation3 + $0x20] sm:$0xff]
    %v221 = vld [vmem:[#allocation3 + $0x28] sm:$0xff]
    %v222 = vld [vmem:[#allocation3 + $0x30] sm:$0xff]
    %v223 = vld [vmem:[#allocation3 + $0x38] sm:$0xff]
    %v224 = vld [vmem:[#allocation3 + $0x40] sm:$0xff]
    %v225 = vld [vmem:[#allocation3 + $0x48] sm:$0xff]
    %v226 = vld [vmem:[#allocation3 + $0x50] sm:$0xff]
    %v227 = vld [vmem:[#allocation3 + $0x58] sm:$0xff]
    %v228 = vld [vmem:[#allocation3 + $0x60] sm:$0xff]
    %v229 = vld [vmem:[#allocation3 + $0x68] sm:$0xff]
    %v230 = vld [vmem:[#allocation3 + $0x70] sm:$0xff]
    %v231 = vld [vmem:[#allocation3 + $0x78] sm:$0xff]
    %v232 = vld [vmem:[#allocation3 + $0x80] sm:$0xff]
    %v233 = vld [vmem:[#allocation3 + $0x88] sm:$0xff]
    %v234 = vld [vmem:[#allocation3 + $0x90] sm:$0xff]
    %v235 = vld [vmem:[#allocation3 + $0x98] sm:$0xff]
    %v236 = vld [vmem:[#allocation3 + $0xa0] sm:$0xff]
    %v237 = vld [vmem:[#allocation3 + $0xa8] sm:$0xff]
    %v238 = vld [vmem:[#allocation3 + $0xb0] sm:$0xff]
    %v239 = vld [vmem:[#allocation3 + $0xb8] sm:$0xff]
    %v240 = vld [vmem:[#allocation3 + $0xc0] sm:$0xff]
    %v241 = vld [vmem:[#allocation3 + $0xc8] sm:$0xff]
    %v242 = vld [vmem:[#allocation3 + $0xd0] sm:$0xff]
    %v243 = vld [vmem:[#allocation3 + $0xd8] sm:$0xff]
    %v244 = vld [vmem:[#allocation3 + $0xe0] sm:$0xff]
    %v245 = vld [vmem:[#allocation3 + $0xe8] sm:$0xff]
    %v246 = vld [vmem:[#allocation3 + $0xf0] sm:$0xff]
    %v247 = vld [vmem:[#allocation3 + $0xf8] sm:$0xff]
    %v248 = vld [vmem:[%s4] sm:$0x3]
    %v250 = vlaneseq
    %v251 = vshrl.u32 %v250, 7
    %v252 = vsub.s32 0, %v251
    %v253 = vrot.slane %v248, %v252
    %v254 = vlaneseq
    %v255 = vshrl.u32 %v254, 7
    %v256 = vsub.s32 1, %v255
    %v257 = vrot.slane %v248, %v256
    %v292 = vunpack.c.l.b16 %v216
    %v293 = vunpack.c.h.b16 %v216
    %v294 = vunpack.c.l.b16 %v217
    %v295 = vunpack.c.h.b16 %v217
    %v296 = vunpack.c.l.b16 %v218
    %v297 = vunpack.c.h.b16 %v218
    %v298 = vunpack.c.l.b16 %v219
    %v299 = vunpack.c.h.b16 %v219
    %v300 = vunpack.c.l.b16 %v220
    %v301 = vunpack.c.h.b16 %v220
    %v302 = vunpack.c.l.b16 %v221
    %v303 = vunpack.c.h.b16 %v221
    %v304 = vunpack.c.l.b16 %v222
    %v305 = vunpack.c.h.b16 %v222
    %v306 = vunpack.c.l.b16 %v223
    %v307 = vunpack.c.h.b16 %v223
    %v308 = vunpack.c.l.b16 %v224
    %v309 = vunpack.c.h.b16 %v224
    %v310 = vunpack.c.l.b16 %v225
    %v311 = vunpack.c.h.b16 %v225
    %v312 = vunpack.c.l.b16 %v226
    %v313 = vunpack.c.h.b16 %v226
    %v314 = vunpack.c.l.b16 %v227
    %v315 = vunpack.c.h.b16 %v227
    %v316 = vunpack.c.l.b16 %v228
    %v317 = vunpack.c.h.b16 %v228
    %v318 = vunpack.c.l.b16 %v229
    %v319 = vunpack.c.h.b16 %v229
    %v320 = vunpack.c.l.b16 %v230
    %v321 = vunpack.c.h.b16 %v230
    %v322 = vunpack.c.l.b16 %v231
    %v323 = vunpack.c.h.b16 %v231
    %v324 = vunpack.c.l.b16 %v232
    %v325 = vunpack.c.h.b16 %v232
    %v326 = vunpack.c.l.b16 %v233
    %v327 = vunpack.c.h.b16 %v233
    %v328 = vunpack.c.l.b16 %v234
    %v329 = vunpack.c.h.b16 %v234
    %v330 = vunpack.c.l.b16 %v235
    %v331 = vunpack.c.h.b16 %v235
    %v332 = vunpack.c.l.b16 %v236
    %v333 = vunpack.c.h.b16 %v236
    %v334 = vunpack.c.l.b16 %v237
    %v335 = vunpack.c.h.b16 %v237
    %v336 = vunpack.c.l.b16 %v238
    %v337 = vunpack.c.h.b16 %v238
    %v338 = vunpack.c.l.b16 %v239
    %v339 = vunpack.c.h.b16 %v239
    %v340 = vunpack.c.l.b16 %v240
    %v341 = vunpack.c.h.b16 %v240
    %v342 = vunpack.c.l.b16 %v241
    %v343 = vunpack.c.h.b16 %v241
    %v344 = vunpack.c.l.b16 %v242
    %v345 = vunpack.c.h.b16 %v242
    %v346 = vunpack.c.l.b16 %v243
    %v347 = vunpack.c.h.b16 %v243
    %v348 = vunpack.c.l.b16 %v244
    %v349 = vunpack.c.h.b16 %v244
    %v350 = vunpack.c.l.b16 %v245
    %v351 = vunpack.c.h.b16 %v245
    %v352 = vunpack.c.l.b16 %v246
    %v353 = vunpack.c.h.b16 %v246
    %v354 = vunpack.c.l.b16 %v247
    %v355 = vunpack.c.h.b16 %v247
    %v356 = vpack.c.b16 %v294, %v292
    %v357 = vpack.c.b16 %v295, %v293
    %v358 = vpack.c.b16 %v298, %v296
    %v359 = vpack.c.b16 %v299, %v297
    %v360 = vpack.c.b16 %v302, %v300
    %v361 = vpack.c.b16 %v303, %v301
    %v362 = vpack.c.b16 %v306, %v304
    %v363 = vpack.c.b16 %v307, %v305
    %v364 = vpack.c.b16 %v310, %v308
    %v365 = vpack.c.b16 %v311, %v309
    %v366 = vpack.c.b16 %v314, %v312
    %v367 = vpack.c.b16 %v315, %v313
    %v368 = vpack.c.b16 %v318, %v316
    %v369 = vpack.c.b16 %v319, %v317
    %v370 = vpack.c.b16 %v322, %v320
    %v371 = vpack.c.b16 %v323, %v321
    %v372 = vpack.c.b16 %v326, %v324
    %v373 = vpack.c.b16 %v327, %v325
    %v374 = vpack.c.b16 %v330, %v328
    %v375 = vpack.c.b16 %v331, %v329
    %v376 = vpack.c.b16 %v334, %v332
    %v377 = vpack.c.b16 %v335, %v333
    %v378 = vpack.c.b16 %v338, %v336
    %v379 = vpack.c.b16 %v339, %v337
    %v380 = vpack.c.b16 %v342, %v340
    %v381 = vpack.c.b16 %v343, %v341
    %v382 = vpack.c.b16 %v346, %v344
    %v383 = vpack.c.b16 %v347, %v345
    %v384 = vpack.c.b16 %v350, %v348
    %v385 = vpack.c.b16 %v351, %v349
    %v386 = vpack.c.b16 %v354, %v352
    %v387 = vpack.c.b16 %v355, %v353
    %420 = vmatprep.subr.bf16.mxu0 %v357
    %421 = vmatpush1.bf16.msra.mxu0 %v356
    %422 = vmatprep.subr.bf16.mxu0 %v359
    %423 = vmatpush1.bf16.msra.mxu0 %v358
    %424 = vmatprep.subr.bf16.mxu0 %v361
    %425 = vmatpush1.bf16.msra.mxu0 %v360
    %426 = vmatprep.subr.bf16.mxu0 %v363
    %427 = vmatpush1.bf16.msra.mxu0 %v362
    %428 = vmatprep.subr.bf16.mxu0 %v365
    %429 = vmatpush1.bf16.msra.mxu0 %v364
    %430 = vmatprep.subr.bf16.mxu0 %v367
    %431 = vmatpush1.bf16.msra.mxu0 %v366
    %432 = vmatprep.subr.bf16.mxu0 %v369
    %433 = vmatpush1.bf16.msra.mxu0 %v368
    %434 = vmatprep.subr.bf16.mxu0 %v371
    %435 = vmatpush1.bf16.msra.mxu0 %v370
    %436 = vmatprep.subr.bf16.mxu0 %v373
    %437 = vmatpush1.bf16.msra.mxu0 %v372
    %438 = vmatprep.subr.bf16.mxu0 %v375
    %439 = vmatpush1.bf16.msra.mxu0 %v374
    %440 = vmatprep.subr.bf16.mxu0 %v377
    %441 = vmatpush1.bf16.msra.mxu0 %v376
    %442 = vmatprep.subr.bf16.mxu0 %v379
    %443 = vmatpush1.bf16.msra.mxu0 %v378
    %444 = vmatprep.subr.bf16.mxu0 %v381
    %445 = vmatpush1.bf16.msra.mxu0 %v380
    %446 = vmatprep.subr.bf16.mxu0 %v383
    %447 = vmatpush1.bf16.msra.mxu0 %v382
    %448 = vmatprep.subr.bf16.mxu0 %v385
    %449 = vmatpush1.bf16.msra.mxu0 %v384
    %450 = vmatprep.subr.bf16.mxu0 %v387
    %451 = vmatpush1.bf16.msra.mxu0 %v386
    %452 = vmatprep.mubr.bf16.mxu0 %v209
    %453 = vmatmul.mubr.bf16.gmra.mrb[0].mxu0 %v208
    %v454 = vpop.f32.mrb[0].mxu0
    %v455 = vadd.f32 %v253, %v454
    %v456 = vpop.f32.mrb[0].mxu0
    %v457 = vadd.f32 %v257, %v456
    %v458 = vpop.f32.mrb[0].mxu0
    %v459 = vadd.f32 %v253, %v458
    %v460 = vpop.f32.mrb[0].mxu0
    %v461 = vadd.f32 %v257, %v460
    %462 = vmatprep.mubr.bf16.mxu0 %v211
    %463 = vmatmul.mubr.bf16.gmra.mrb[0].mxu0 %v210
    %v464 = vpop.f32.mrb[0].mxu0
    %v465 = vadd.f32 %v253, %v464
    %v466 = vpop.f32.mrb[0].mxu0
    %v467 = vadd.f32 %v257, %v466
    %v468 = vpop.f32.mrb[0].mxu0
    %v469 = vadd.f32 %v253, %v468
    %v470 = vpop.f32.mrb[0].mxu0
    %v471 = vadd.f32 %v257, %v470
    %472 = vmatprep.mubr.bf16.mxu0 %v213
    %473 = vmatmul.mubr.bf16.gmra.mrb[0].mxu0 %v212
    %v474 = vpop.f32.mrb[0].mxu0
    %v475 = vadd.f32 %v253, %v474
    %v476 = vpop.f32.mrb[0].mxu0
    %v477 = vadd.f32 %v257, %v476
    %v478 = vpop.f32.mrb[0].mxu0
    %v479 = vadd.f32 %v253, %v478
    %v480 = vpop.f32.mrb[0].mxu0
    %v481 = vadd.f32 %v257, %v480
    %482 = vmatprep.mubr.bf16.mxu0 %v215
    %483 = vmatmul.mubr.bf16.gmra.mrb[0].mxu0 %v214
    %v484 = vpop.f32.mrb[0].mxu0
    %v485 = vadd.f32 %v253, %v484
    %v486 = vpop.f32.mrb[0].mxu0
    %v487 = vadd.f32 %v257, %v486
    %v488 = vpop.f32.mrb[0].mxu0
    %v489 = vpop.f32.mrb[0].mxu0
    %490 = vdwg.mxu0
    %v491 = vmax.f32 %v455, 0.0
    %v492 = vmax.f32 %v457, 0.0
    %v493 = vmax.f32 %v459, 0.0
    %v494 = vmax.f32 %v461, 0.0
    %v495 = vmax.f32 %v465, 0.0
    %v496 = vmax.f32 %v467, 0.0
    %v497 = vmax.f32 %v469, 0.0
    %v498 = vmax.f32 %v471, 0.0
    %v499 = vmax.f32 %v475, 0.0
    %v500 = vmax.f32 %v477, 0.0
    %v501 = vmax.f32 %v479, 0.0
    %v502 = vmax.f32 %v481, 0.0
    %v503 = vmax.f32 %v485, 0.0
    %v504 = vmax.f32 %v487, 0.0
    %v505 = vpack.c.bf16 %v493, %v491
    %v506 = vpack.c.bf16 %v494, %v492
    %v507 = vpack.c.bf16 %v497, %v495
    %v508 = vpack.c.bf16 %v498, %v496
    %v509 = vpack.c.bf16 %v501, %v499
    %v510 = vpack.c.bf16 %v502, %v500
    %v511 = vpack.c.bf16 %v503, %v503
    %v512 = vpack.c.bf16 %v504, %v504
    %v513 = vld [vmem:[#allocation5] sm:$0xff]
    %v514 = vld [vmem:[#allocation5 + $0x8] sm:$0xff]
    %v515 = vld [vmem:[#allocation5 + $0x10] sm:$0xff]
    %v516 = vld [vmem:[#allocation5 + $0x18] sm:$0xff]
    %v517 = vld [vmem:[#allocation5 + $0x20] sm:$0xff]
    %v518 = vld [vmem:[#allocation5 + $0x28] sm:$0xff]
    %v519 = vld [vmem:[#allocation5 + $0x30] sm:$0xff]
    %v520 = vld [vmem:[#allocation5 + $0x38] sm:$0xff]
    %v521 = vld [vmem:[#allocation5 + $0x40] sm:$0xff]
    %v522 = vld [vmem:[#allocation5 + $0x48] sm:$0xff]
    %v523 = vld [vmem:[#allocation5 + $0x50] sm:$0xff]
    %v524 = vld [vmem:[#allocation5 + $0x58] sm:$0xff]
    %v525 = vld [vmem:[#allocation5 + $0x60] sm:$0xff]
    %v526 = vld [vmem:[#allocation5 + $0x68] sm:$0xff]
    %v527 = vld [vmem:[#allocation5 + $0x70] sm:$0xff]
    %v528 = vld [vmem:[#allocation5 + $0x78] sm:$0xff]
    %v529 = vld [vmem:[#allocation5 + $0x80] sm:$0xff]
    %v530 = vld [vmem:[#allocation5 + $0x88] sm:$0xff]
    %v531 = vld [vmem:[#allocation5 + $0x90] sm:$0xff]
    %v532 = vld [vmem:[#allocation5 + $0x98] sm:$0xff]
    %v533 = vld [vmem:[#allocation5 + $0xa0] sm:$0xff]
    %v534 = vld [vmem:[#allocation5 + $0xa8] sm:$0xff]
    %v535 = vld [vmem:[#allocation5 + $0xb0] sm:$0xff]
    %v536 = vld [vmem:[#allocation5 + $0xb8] sm:$0xff]
    %v537 = vld [vmem:[#allocation5 + $0xc0] sm:$0xff]
    %v538 = vld [vmem:[#allocation5 + $0xc8] sm:$0xff]
    %v539 = vld [vmem:[#allocation5 + $0xd0] sm:$0xff]
    %v540 = vld [vmem:[#allocation5 + $0xd8] sm:$0xff]
    %v541 = vld [vmem:[#allocation5 + $0xe0] sm:$0xff]
    %v542 = vld [vmem:[#allocation5 + $0xe8] sm:$0xff]
    %v543 = vld [vmem:[#allocation5 + $0xf0] sm:$0xff]
    %v544 = vld [vmem:[#allocation5 + $0xf8] sm:$0xff]
    %v545 = vld [vmem:[%s6] sm:$0x3]
    %v547 = vlaneseq
    %v548 = vshrl.u32 %v547, 7
    %v549 = vsub.s32 0, %v548
    %v550 = vrot.slane %v545, %v549
    %v551 = vlaneseq
    %v552 = vshrl.u32 %v551, 7
    %v553 = vsub.s32 1, %v552
    %v554 = vrot.slane %v545, %v553
    %v589 = vunpack.c.l.b16 %v513
    %v590 = vunpack.c.h.b16 %v513
    %v591 = vunpack.c.l.b16 %v514
    %v592 = vunpack.c.h.b16 %v514
    %v593 = vunpack.c.l.b16 %v515
    %v594 = vunpack.c.h.b16 %v515
    %v595 = vunpack.c.l.b16 %v516
    %v596 = vunpack.c.h.b16 %v516
    %v597 = vunpack.c.l.b16 %v517
    %v598 = vunpack.c.h.b16 %v517
    %v599 = vunpack.c.l.b16 %v518
    %v600 = vunpack.c.h.b16 %v518
    %v601 = vunpack.c.l.b16 %v519
    %v602 = vunpack.c.h.b16 %v519
    %v603 = vunpack.c.l.b16 %v520
    %v604 = vunpack.c.h.b16 %v520
    %v605 = vunpack.c.l.b16 %v521
    %v606 = vunpack.c.h.b16 %v521
    %v607 = vunpack.c.l.b16 %v522
    %v608 = vunpack.c.h.b16 %v522
    %v609 = vunpack.c.l.b16 %v523
    %v610 = vunpack.c.h.b16 %v523
    %v611 = vunpack.c.l.b16 %v524
    %v612 = vunpack.c.h.b16 %v524
    %v613 = vunpack.c.l.b16 %v525
    %v614 = vunpack.c.h.b16 %v525
    %v615 = vunpack.c.l.b16 %v526
    %v616 = vunpack.c.h.b16 %v526
    %v617 = vunpack.c.l.b16 %v527
    %v618 = vunpack.c.h.b16 %v527
    %v619 = vunpack.c.l.b16 %v528
    %v620 = vunpack.c.h.b16 %v528
    %v621 = vunpack.c.l.b16 %v529
    %v622 = vunpack.c.h.b16 %v529
    %v623 = vunpack.c.l.b16 %v530
    %v624 = vunpack.c.h.b16 %v530
    %v625 = vunpack.c.l.b16 %v531
    %v626 = vunpack.c.h.b16 %v531
    %v627 = vunpack.c.l.b16 %v532
    %v628 = vunpack.c.h.b16 %v532
    %v629 = vunpack.c.l.b16 %v533
    %v630 = vunpack.c.h.b16 %v533
    %v631 = vunpack.c.l.b16 %v534
    %v632 = vunpack.c.h.b16 %v534
    %v633 = vunpack.c.l.b16 %v535
    %v634 = vunpack.c.h.b16 %v535
    %v635 = vunpack.c.l.b16 %v536
    %v636 = vunpack.c.h.b16 %v536
    %v637 = vunpack.c.l.b16 %v537
    %v638 = vunpack.c.h.b16 %v537
    %v639 = vunpack.c.l.b16 %v538
    %v640 = vunpack.c.h.b16 %v538
    %v641 = vunpack.c.l.b16 %v539
    %v642 = vunpack.c.h.b16 %v539
    %v643 = vunpack.c.l.b16 %v540
    %v644 = vunpack.c.h.b16 %v540
    %v645 = vunpack.c.l.b16 %v541
    %v646 = vunpack.c.h.b16 %v541
    %v647 = vunpack.c.l.b16 %v542
    %v648 = vunpack.c.h.b16 %v542
    %v649 = vunpack.c.l.b16 %v543
    %v650 = vunpack.c.h.b16 %v543
    %v651 = vunpack.c.l.b16 %v544
    %v652 = vunpack.c.h.b16 %v544
    %v653 = vpack.c.b16 %v591, %v589
    %v654 = vpack.c.b16 %v592, %v590
    %v655 = vpack.c.b16 %v595, %v593
    %v656 = vpack.c.b16 %v596, %v594
    %v657 = vpack.c.b16 %v599, %v597
    %v658 = vpack.c.b16 %v600, %v598
    %v659 = vpack.c.b16 %v603, %v601
    %v660 = vpack.c.b16 %v604, %v602
    %v661 = vpack.c.b16 %v607, %v605
    %v662 = vpack.c.b16 %v608, %v606
    %v663 = vpack.c.b16 %v611, %v609
    %v664 = vpack.c.b16 %v612, %v610
    %v665 = vpack.c.b16 %v615, %v613
    %v666 = vpack.c.b16 %v616, %v614
    %v667 = vpack.c.b16 %v619, %v617
    %v668 = vpack.c.b16 %v620, %v618
    %v669 = vpack.c.b16 %v623, %v621
    %v670 = vpack.c.b16 %v624, %v622
    %v671 = vpack.c.b16 %v627, %v625
    %v672 = vpack.c.b16 %v628, %v626
    %v673 = vpack.c.b16 %v631, %v629
    %v674 = vpack.c.b16 %v632, %v630
    %v675 = vpack.c.b16 %v635, %v633
    %v676 = vpack.c.b16 %v636, %v634
    %v677 = vpack.c.b16 %v639, %v637
    %v678 = vpack.c.b16 %v640, %v638
    %v679 = vpack.c.b16 %v643, %v641
    %v680 = vpack.c.b16 %v644, %v642
    %v681 = vpack.c.b16 %v647, %v645
    %v682 = vpack.c.b16 %v648, %v646
    %v683 = vpack.c.b16 %v651, %v649
    %v684 = vpack.c.b16 %v652, %v650
    %717 = vmatprep.subr.bf16.mxu0 %v654
    %718 = vmatpush1.bf16.msra.mxu0 %v653
    %719 = vmatprep.subr.bf16.mxu0 %v656
    %720 = vmatpush1.bf16.msra.mxu0 %v655
    %721 = vmatprep.subr.bf16.mxu0 %v658
    %722 = vmatpush1.bf16.msra.mxu0 %v657
    %723 = vmatprep.subr.bf16.mxu0 %v660
    %724 = vmatpush1.bf16.msra.mxu0 %v659
    %725 = vmatprep.subr.bf16.mxu0 %v662
    %726 = vmatpush1.bf16.msra.mxu0 %v661
    %727 = vmatprep.subr.bf16.mxu0 %v664
    %728 = vmatpush1.bf16.msra.mxu0 %v663
    %729 = vmatprep.subr.bf16.mxu0 %v666
    %730 = vmatpush1.bf16.msra.mxu0 %v665
    %731 = vmatprep.subr.bf16.mxu0 %v668
    %732 = vmatpush1.bf16.msra.mxu0 %v667
    %733 = vmatprep.subr.bf16.mxu0 %v670
    %734 = vmatpush1.bf16.msra.mxu0 %v669
    %735 = vmatprep.subr.bf16.mxu0 %v672
    %736 = vmatpush1.bf16.msra.mxu0 %v671
    %737 = vmatprep.subr.bf16.mxu0 %v674
    %738 = vmatpush1.bf16.msra.mxu0 %v673
    %739 = vmatprep.subr.bf16.mxu0 %v676
    %740 = vmatpush1.bf16.msra.mxu0 %v675
    %741 = vmatprep.subr.bf16.mxu0 %v678
    %742 = vmatpush1.bf16.msra.mxu0 %v677
    %743 = vmatprep.subr.bf16.mxu0 %v680
    %744 = vmatpush1.bf16.msra.mxu0 %v679
    %745 = vmatprep.subr.bf16.mxu0 %v682
    %746 = vmatpush1.bf16.msra.mxu0 %v681
    %747 = vmatprep.subr.bf16.mxu0 %v684
    %748 = vmatpush1.bf16.msra.mxu0 %v683
    %749 = vmatprep.mubr.bf16.mxu0 %v506
    %750 = vmatmul.mubr.bf16.gmra.mrb[0].mxu0 %v505
    %v751 = vpop.f32.mrb[0].mxu0
    %v752 = vadd.f32 %v550, %v751
    %v753 = vpop.f32.mrb[0].mxu0
    %v754 = vadd.f32 %v554, %v753
    %v755 = vpop.f32.mrb[0].mxu0
    %v756 = vadd.f32 %v550, %v755
    %v757 = vpop.f32.mrb[0].mxu0
    %v758 = vadd.f32 %v554, %v757
    %759 = vmatprep.mubr.bf16.mxu0 %v508
    %760 = vmatmul.mubr.bf16.gmra.mrb[0].mxu0 %v507
    %v761 = vpop.f32.mrb[0].mxu0
    %v762 = vadd.f32 %v550, %v761
    %v763 = vpop.f32.mrb[0].mxu0
    %v764 = vadd.f32 %v554, %v763
    %v765 = vpop.f32.mrb[0].mxu0
    %v766 = vadd.f32 %v550, %v765
    %v767 = vpop.f32.mrb[0].mxu0
    %v768 = vadd.f32 %v554, %v767
    %769 = vmatprep.mubr.bf16.mxu0 %v510
    %770 = vmatmul.mubr.bf16.gmra.mrb[0].mxu0 %v509
    %v771 = vpop.f32.mrb[0].mxu0
    %v772 = vadd.f32 %v550, %v771
    %v773 = vpop.f32.mrb[0].mxu0
    %v774 = vadd.f32 %v554, %v773
    %v775 = vpop.f32.mrb[0].mxu0
    %v776 = vadd.f32 %v550, %v775
    %v777 = vpop.f32.mrb[0].mxu0
    %v778 = vadd.f32 %v554, %v777
    %779 = vmatprep.mubr.bf16.mxu0 %v512
    %780 = vmatmul.mubr.bf16.gmra.mrb[0].mxu0 %v511
    %v781 = vpop.f32.mrb[0].mxu0
    %v782 = vadd.f32 %v550, %v781
    %v783 = vpop.f32.mrb[0].mxu0
    %v784 = vadd.f32 %v554, %v783
    %v785 = vpop.f32.mrb[0].mxu0
    %v786 = vpop.f32.mrb[0].mxu0
    %787 = vdwg.mxu0
    %v788 = vmax.f32 %v752, 0.0
    %v789 = vmax.f32 %v754, 0.0
    %v790 = vmax.f32 %v756, 0.0
    %v791 = vmax.f32 %v758, 0.0
    %v792 = vmax.f32 %v762, 0.0
    %v793 = vmax.f32 %v764, 0.0
    %v794 = vmax.f32 %v766, 0.0
    %v795 = vmax.f32 %v768, 0.0
    %v796 = vmax.f32 %v772, 0.0
    %v797 = vmax.f32 %v774, 0.0
    %v798 = vmax.f32 %v776, 0.0
    %v799 = vmax.f32 %v778, 0.0
    %v800 = vmax.f32 %v782, 0.0
    %v801 = vmax.f32 %v784, 0.0
    %v802 = vld [vmem:[%s7] sm:$0x3]
    %v804 = vlaneseq
    %v805 = vshrl.u32 %v804, 7
    %v806 = vsub.s32 0, %v805
    %v807 = vrot.slane %v802, %v806
    %v808 = vlaneseq
    %v809 = vshrl.u32 %v808, 7
    %v810 = vsub.s32 1, %v809
    %v811 = vrot.slane %v802, %v810
    %v814 = vmul.f32 %v788, %v807
    %v815 = vmul.f32 %v789, %v811
    %v816 = vmul.f32 %v790, %v807
    %v817 = vmul.f32 %v791, %v811
    %v818 = vmul.f32 %v792, %v807
    %v819 = vmul.f32 %v793, %v811
    %v820 = vmul.f32 %v794, %v807
    %v821 = vmul.f32 %v795, %v811
    %v822 = vmul.f32 %v796, %v807
    %v823 = vmul.f32 %v797, %v811
    %v824 = vmul.f32 %v798, %v807
    %v825 = vmul.f32 %v799, %v811
    %v826 = vmul.f32 %v800, %v807
    %v827 = vmul.f32 %v801, %v811
    %v828 = vadd.f32 %v814, %v815
    %829 = vadd.xlane.f32.xlu0 %v828
    %v830 = vpop.xlane.xlu0 %829
    %v831 = vadd.f32 %v816, %v817
    %832 = vadd.xlane.f32.xlu0 %v831
    %v833 = vpop.xlane.xlu0 %832
    %v834 = vadd.f32 %v818, %v819
    %835 = vadd.xlane.f32.xlu0 %v834
    %v836 = vpop.xlane.xlu0 %835
    %v837 = vadd.f32 %v820, %v821
    %838 = vadd.xlane.f32.xlu0 %v837
    %v839 = vpop.xlane.xlu0 %838
    %v840 = vadd.f32 %v822, %v823
    %841 = vadd.xlane.f32.xlu0 %v840
    %v842 = vpop.xlane.xlu0 %841
    %v843 = vadd.f32 %v824, %v825
    %844 = vadd.xlane.f32.xlu0 %v843
    %v845 = vpop.xlane.xlu0 %844
    %v846 = vadd.f32 %v826, %v827
    %847 = vadd.xlane.f32.xlu0 %v846
    %v848 = vpop.xlane.xlu0 %847
    %v849 = vld [vmem:[#allocation2] sm:$0x1]
    %v851 = vlaneseq
    %v852 = vshrl.u32 %v851, 7
    %v853 = vsub.s32 0, %v852
    %v854 = vrot.slane %v849, %v853
    %v856 = vadd.f32 %v830, %v854
    %v857 = vadd.f32 %v833, %v854
    %v858 = vadd.f32 %v836, %v854
    %v859 = vadd.f32 %v839, %v854
    %v860 = vadd.f32 %v842, %v854
    %v861 = vadd.f32 %v845, %v854
    %v862 = vadd.f32 %v848, %v854
    %vm863 = vcmask 7168
    %864 = vst.msk [vmem:[%s9] sm:$0xff] %vm863, %v856
    %865 = vst.msk [vmem:[%s9 + $0x8] sm:$0xff] %vm863, %v857
    %866 = vst.msk [vmem:[%s9 + $0x10] sm:$0xff] %vm863, %v858
    %867 = vst.msk [vmem:[%s9 + $0x18] sm:$0xff] %vm863, %v859
    %868 = vst.msk [vmem:[%s9 + $0x20] sm:$0xff] %vm863, %v860
    %869 = vst.msk [vmem:[%s9 + $0x28] sm:$0xff] %vm863, %v861
    %870 = vst.msk [vmem:[%s9 + $0x30] sm:$0xff] %vm863, %v862
    // Predicated region
    $region46: #{v_forward.1} parent=1 // pred_check
      _
    $region47: #{v_forward.1} parent=1 // pred_check_branch
      %872 = sbr.rel (0) target = $region49
    $region48: #{v_forward.1} parent=1 // pred_region
      _
    $region49: #{v_forward.1} parent=1 // pred_fallthru
      _
    // Predicated region
    $region50: #{v_forward.1} parent=1 // pred_check
      _
    $region51: #{v_forward.1} parent=1 // pred_check_branch
      %874 = sbr.rel (0) target = $region53
    $region52: #{v_forward.1} parent=1 // pred_region
      _
    $region53: #{v_forward.1} parent=1 // pred_fallthru
      _
    %875 = vsyncpa [#allocation4], 1
    %876 = vsyncpa [#allocation6], 1

</llo_original>
